<compile_context>
chip_gen: v6e
topology: v6e:2x2x1
jax: 0.10.0
libtpu: 0.0.40
codegen_flags: <defaults>
</compile_context>

<pallas_src>
import functools

import jax
import jax.numpy as jnp
from jax.experimental import pallas as pl
from jax.experimental.pallas import tpu as pltpu

N_PAD = 128  # lane-dense MXU N tile for W^T (keep exactly 128)
O_PAD = 8    # narrow f32 output slab width (>= 3 classes, contiguous 32 B/row in HBM)


def _round_up(v, m):
    return ((v + m - 1) // m) * m


def linear_kernel(x_ref, w_ref, b_ref, o_ref):
    # (TB, 768) f32 -> bf16 in-register, MXU matmul with f32 accumulation,
    # then keep only the first O_PAD lanes (real logits + zero pad) for the store.
    x_bf = x_ref[...].astype(jnp.bfloat16)
    acc = jnp.dot(x_bf, w_ref[...], preferred_element_type=jnp.float32)   # (TB, 128)
    o_ref[...] = acc[:, : o_ref.shape[-1]] + b_ref[...]                   # (TB, 8) f32


@functools.partial(jax.jit, static_argnames=("tb_max", "xla_small_batch"))
def sentiment_classifier_forward(x, w, b, *, tb_max=2048, xla_small_batch=0):
    """Forward pass of SentimentClassifier: logits = x @ W^T + b.

    x: (B, 768) f32   w: (3, 768) f32 (PyTorch layout)   b: (3,) f32
    returns: (B, 3) f32 logits
    """
    B, D = x.shape
    O = w.shape[0]

    if B <= xla_small_batch:
        # Tiny-batch fallback: the pallas_call is pure launch overhead at this size.
        return x @ jnp.transpose(w) + b

    # --- wrapper-side layout prep (tiny, O(KB)) -----------------------------
    # W^T zero-padded to a lane-dense 128-wide tile; stays resident across the grid.
    w_t = jnp.zeros((D, N_PAD), dtype=jnp.bfloat16)
    w_t = w_t.at[:, :O].set(jnp.transpose(w).astype(jnp.bfloat16))
    b_pad = jnp.zeros((1, O_PAD), dtype=jnp.float32).at[:, :O].set(b.astype(jnp.float32))

    # Batch tile: aim for >= 2 tiles once B is large (v7x megacore sharding),
    # 16-row aligned, capped so double-buffered f32 tiles fit every generation's
    # scoped-VMEM default.  No x padding: the ragged tail block is handled by Pallas.
    tb_target = max(16, _round_up(-(-B // 2), 16))
    TB = min(tb_max, tb_target, _round_up(B, 8))
    n_tiles = pl.cdiv(B, TB)

    cost = pl.CostEstimate(
        flops=2 * B * D * N_PAD,
        transcendentals=0,
        bytes_accessed=B * D * 4 + D * N_PAD * 2 + B * O_PAD * 4,
    )

    out = pl.pallas_call(
        linear_kernel,
        out_shape=jax.ShapeDtypeStruct((B, O_PAD), jnp.float32),
        grid=(n_tiles,),
        in_specs=[
            pl.BlockSpec((TB, D), lambda i: (i, 0)),        # x: streamed per batch tile
            pl.BlockSpec((D, N_PAD), lambda i: (0, 0)),     # W^T: resident across grid
            pl.BlockSpec((1, O_PAD), lambda i: (0, 0)),     # bias: resident
        ],
        out_specs=pl.BlockSpec((TB, O_PAD), lambda i: (i, 0)),
        compiler_params=pltpu.CompilerParams(
            dimension_semantics=("parallel",),              # shard batch tiles across TCs
        ),
        cost_estimate=cost,
    )(x, w_t, b_pad)

    # Strip the zero-padded lanes (O_PAD -> 3).
    return out[:, :O]


if __name__ == "__main__":
    key = jax.random.PRNGKey(0)
    k_x, k_w, k_b = jax.random.split(key, 3)

    B, D, O = 8, 768, 3  # hidden fixed at 768 / 3 classes by the module

    x = jax.random.normal(k_x, (B, D), dtype=jnp.float32)
    # Deterministic params (mimicking nn.Linear init scale 1/sqrt(768)).
    bound = 1.0 / jnp.sqrt(jnp.float32(D))
    w = jax.random.uniform(k_w, (O, D), dtype=jnp.float32, minval=-bound, maxval=bound)
    b = jax.random.uniform(k_b, (O,), dtype=jnp.float32, minval=-bound, maxval=bound)

    logits = sentiment_classifier_forward(x, w, b)
    jax.block_until_ready(logits)

    # Reference: bf16-rounded inputs, f32 accumulation (matches the MXU path).
    ref_bf = (
        x.astype(jnp.bfloat16).astype(jnp.float32)
        @ jnp.transpose(w).astype(jnp.bfloat16).astype(jnp.float32)
        + b
    )
    ref_f32 = x @ w.T + b

    assert logits.shape == (B, O)
    assert jnp.allclose(logits, ref_bf, atol=1e-3, rtol=1e-3)
    assert jnp.allclose(logits, ref_f32, atol=2e-2, rtol=2e-2)

    print("KERNEL_OK")
</pallas_src>

<mosaic_0001>
module attributes {stable_mosaic.version = 11 : i64} {
  func.func @linear_kernel(%arg0: i32, %arg1: memref<8x768xf32, #tpu.memory_space<vmem>>, %arg2: memref<768x128xbf16, #tpu.memory_space<vmem>>, %arg3: memref<1x8xf32, #tpu.memory_space<vmem>>, %arg4: memref<8x8xf32, #tpu.memory_space<vmem>>) attributes {dimension_semantics = [#tpu.dimension_semantics<parallel>], iteration_bounds = array<i64: 1>, scalar_prefetch = 0 : i64, scratch_operands = 0 : i64, tpu.core_type = #tpu.core_type<tc>, window_params = [{transform_indices = @transform_0, window_bounds = array<i64: 8, 768>}, {pipeline_mode = #tpu.pipeline_mode<synchronous>, transform_indices = @transform_1, window_bounds = array<i64: 768, 128>}, {pipeline_mode = #tpu.pipeline_mode<synchronous>, transform_indices = @transform_2, window_bounds = array<i64: 1, 8>}, {transform_indices = @transform_3, window_bounds = array<i64: 8, 8>}]} {
    %c0 = arith.constant 0 : index
    %c0_0 = arith.constant 0 : index
    %0 = vector.load %arg1[%c0, %c0_0] : memref<8x768xf32, #tpu.memory_space<vmem>>, vector<8x768xf32>
    %1 = arith.truncf %0 : vector<8x768xf32> to vector<8x768xbf16>
    %c0_1 = arith.constant 0 : index
    %c0_2 = arith.constant 0 : index
    %2 = vector.load %arg2[%c0_1, %c0_2] : memref<768x128xbf16, #tpu.memory_space<vmem>>, vector<768x128xbf16>
    %cst = arith.constant dense<0.000000e+00> : vector<8x128xf32>
    %3 = tpu.matmul %1, %2, %cst {dimension_numbers = #tpu.dot_dimension_numbers<[1], [0], [0], [1], [0, 0, 1, 1], [], []>} : vector<8x768xbf16>, vector<768x128xbf16>, vector<8x128xf32> -> vector<8x128xf32>
    %4 = vector.extract_strided_slice %3 {offsets = [0, 0], sizes = [8, 8], strides = [1, 1]} : vector<8x128xf32> to vector<8x8xf32>
    %c0_3 = arith.constant 0 : index
    %c0_4 = arith.constant 0 : index
    %5 = vector.load %arg3[%c0_3, %c0_4] : memref<1x8xf32, #tpu.memory_space<vmem>>, vector<1x8xf32>
    %6 = vector.broadcast %5 : vector<1x8xf32> to vector<8x8xf32>
    %7 = arith.addf %4, %6 : vector<8x8xf32>
    %c0_5 = arith.constant 0 : index
    %c0_6 = arith.constant 0 : index
    %8 = vector.load %arg4[%c0_5, %c0_6] : memref<8x8xf32, #tpu.memory_space<vmem>>, vector<8x8xf32>
    tpu.vector_store %arg4[%c0_5, %c0_6], %7 {strides = array<i32>} : memref<8x8xf32, #tpu.memory_space<vmem>>, vector<8x8xf32>,
    return
  }
  func.func @transform_0(%arg0: i32) -> (i32, i32) {
    %c0_i32 = arith.constant 0 : i32
    %c0_i32_0 = arith.constant 0 : i32
    return %arg0, %c0_i32 : i32, i32
  }
  func.func @transform_1(%arg0: i32) -> (i32, i32) {
    %c0_i32 = arith.constant 0 : i32
    %c0_i32_0 = arith.constant 0 : i32
    %c0_i32_1 = arith.constant 0 : i32
    return %c0_i32, %c0_i32_0 : i32, i32
  }
  func.func @transform_2(%arg0: i32) -> (i32, i32) {
    %c0_i32 = arith.constant 0 : i32
    %c0_i32_0 = arith.constant 0 : i32
    %c0_i32_1 = arith.constant 0 : i32
    return %c0_i32, %c0_i32_0 : i32, i32
  }
  func.func @transform_3(%arg0: i32) -> (i32, i32) {
    %c0_i32 = arith.constant 0 : i32
    %c0_i32_0 = arith.constant 0 : i32
    return %arg0, %c0_i32 : i32, i32
  }
}

</mosaic_0001>

<llo_original>
// kernel: sentiment_classifier_forward.1
$region0: #{sentiment_classifier_forward.1}
  #allocation0 [shape = 'u32[]', space=smem, size = 0x4, offset = 0x4, fixed_abs, tag = 'smem constant byte address 0x4 - core index']
  #allocation1 [shape = 'u32[144,128]{1,0:T(1,128)}', space=vmem, size = 0x12000, scoped, tag = 'internal scratch']
  %s0 = inlined_call_operand.vmem [shape: f32[8,768], index: 0, kind: input, shape index: {}]
  %s1 = inlined_call_operand.vmem [shape: bf16[768,128], index: 1, kind: input, shape index: {}]
  %s2 = inlined_call_operand.vmem [shape: f32[1,8], index: 2, kind: input, shape index: {}]
  %s3 = inlined_call_operand.vmem [shape: f32[8,8], index: 3, kind: output, shape index: {}]
  %s4 = sld [smem:[#allocation0]]
  $region22: #{sentiment_classifier_forward.1} parent=0
    _
  %s6 = ssub.s32 1, %s4
  %s7 = scalar_select 0, %s6, %s4
  // Predicated region
  $region2: #{sentiment_classifier_forward.1} parent=0 // pred_check
    _
  $region3: #{sentiment_classifier_forward.1} parent=0 // pred_check_branch
    %9 = sbr.rel (0) target = $region5
  $region4: #{sentiment_classifier_forward.1} parent=0 // pred_region
    _
  $region5: #{sentiment_classifier_forward.1} parent=0 // pred_fallthru
    _
  // Predicated region
  $region6: #{sentiment_classifier_forward.1} parent=0 // pred_check
    _
  $region7: #{sentiment_classifier_forward.1} parent=0 // pred_check_branch
    %11 = sbr.rel (0) target = $region9
  $region8: #{sentiment_classifier_forward.1} parent=0 // pred_region
    _
  $region9: #{sentiment_classifier_forward.1} parent=0 // pred_fallthru
    _
  // Predicated region
  $region10: #{sentiment_classifier_forward.1} parent=0 // pred_check
    _
  $region11: #{sentiment_classifier_forward.1} parent=0 // pred_check_branch
    %13 = sbr.rel (0) target = $region13
  $region12: #{sentiment_classifier_forward.1} parent=0 // pred_region
    _
  $region13: #{sentiment_classifier_forward.1} parent=0 // pred_fallthru
    _
  %v15 = vld [vmem:[%s0] sm:$0xff]
  %v16 = vld [vmem:[%s0 + $0x8] sm:$0xff]
  %v17 = vld [vmem:[%s0 + $0x10] sm:$0xff]
  %v18 = vld [vmem:[%s0 + $0x18] sm:$0xff]
  %v19 = vld [vmem:[%s0 + $0x20] sm:$0xff]
  %v20 = vld [vmem:[%s0 + $0x28] sm:$0xff]
  %v21 = vpack.c.bf16 %v15, %v15
  %v22 = vpack.c.bf16 %v16, %v16
  %v23 = vpack.c.bf16 %v17, %v17
  %v24 = vpack.c.bf16 %v18, %v18
  %v25 = vpack.c.bf16 %v19, %v19
  %v26 = vpack.c.bf16 %v20, %v20
  %v27 = vld [vmem:[%s1] sm:$0xf]
  %v28 = vld [vmem:[%s1 + $0x4] sm:$0xf]
  %v29 = vld [vmem:[%s1 + $0x8] sm:$0xf]
  %v30 = vld [vmem:[%s1 + $0xc] sm:$0xf]
  %v31 = vld [vmem:[%s1 + $0x10] sm:$0xf]
  %v32 = vld [vmem:[%s1 + $0x14] sm:$0xf]
  %v33 = vld [vmem:[%s1 + $0x18] sm:$0xf]
  %v34 = vld [vmem:[%s1 + $0x1c] sm:$0xf]
  %v35 = vld [vmem:[%s1 + $0x20] sm:$0xf]
  %v36 = vld [vmem:[%s1 + $0x24] sm:$0xf]
  %v37 = vld [vmem:[%s1 + $0x28] sm:$0xf]
  %v38 = vld [vmem:[%s1 + $0x2c] sm:$0xf]
  %v39 = vld [vmem:[%s1 + $0x30] sm:$0xf]
  %v40 = vld [vmem:[%s1 + $0x34] sm:$0xf]
  %v41 = vld [vmem:[%s1 + $0x38] sm:$0xf]
  %v42 = vld [vmem:[%s1 + $0x3c] sm:$0xf]
  %v43 = vld [vmem:[%s1 + $0x40] sm:$0xf]
  %v44 = vld [vmem:[%s1 + $0x44] sm:$0xf]
  %v45 = vld [vmem:[%s1 + $0x48] sm:$0xf]
  %v46 = vld [vmem:[%s1 + $0x4c] sm:$0xf]
  %v47 = vld [vmem:[%s1 + $0x50] sm:$0xf]
  %v48 = vld [vmem:[%s1 + $0x54] sm:$0xf]
  %v49 = vld [vmem:[%s1 + $0x58] sm:$0xf]
  %v50 = vld [vmem:[%s1 + $0x5c] sm:$0xf]
  %v51 = vld [vmem:[%s1 + $0x60] sm:$0xf]
  %v52 = vld [vmem:[%s1 + $0x64] sm:$0xf]
  %v53 = vld [vmem:[%s1 + $0x68] sm:$0xf]
  %v54 = vld [vmem:[%s1 + $0x6c] sm:$0xf]
  %v55 = vld [vmem:[%s1 + $0x70] sm:$0xf]
  %v56 = vld [vmem:[%s1 + $0x74] sm:$0xf]
  %v57 = vld [vmem:[%s1 + $0x78] sm:$0xf]
  %v58 = vld [vmem:[%s1 + $0x7c] sm:$0xf]
  %v59 = vld [vmem:[%s1 + $0x80] sm:$0xf]
  %v60 = vld [vmem:[%s1 + $0x84] sm:$0xf]
  %v61 = vld [vmem:[%s1 + $0x88] sm:$0xf]
  %v62 = vld [vmem:[%s1 + $0x8c] sm:$0xf]
  %v63 = vld [vmem:[%s1 + $0x90] sm:$0xf]
  %v64 = vld [vmem:[%s1 + $0x94] sm:$0xf]
  %v65 = vld [vmem:[%s1 + $0x98] sm:$0xf]
  %v66 = vld [vmem:[%s1 + $0x9c] sm:$0xf]
  %v67 = vld [vmem:[%s1 + $0xa0] sm:$0xf]
  %v68 = vld [vmem:[%s1 + $0xa4] sm:$0xf]
  %v69 = vld [vmem:[%s1 + $0xa8] sm:$0xf]
  %v70 = vld [vmem:[%s1 + $0xac] sm:$0xf]
  %v71 = vld [vmem:[%s1 + $0xb0] sm:$0xf]
  %v72 = vld [vmem:[%s1 + $0xb4] sm:$0xf]
  %v73 = vld [vmem:[%s1 + $0xb8] sm:$0xf]
  %v74 = vld [vmem:[%s1 + $0xbc] sm:$0xf]
  %v75 = vld [vmem:[%s1 + $0xc0] sm:$0xf]
  %v76 = vld [vmem:[%s1 + $0xc4] sm:$0xf]
  %v77 = vld [vmem:[%s1 + $0xc8] sm:$0xf]
  %v78 = vld [vmem:[%s1 + $0xcc] sm:$0xf]
  %v79 = vld [vmem:[%s1 + $0xd0] sm:$0xf]
  %v80 = vld [vmem:[%s1 + $0xd4] sm:$0xf]
  %v81 = vld [vmem:[%s1 + $0xd8] sm:$0xf]
  %v82 = vld [vmem:[%s1 + $0xdc] sm:$0xf]
  %v83 = vld [vmem:[%s1 + $0xe0] sm:$0xf]
  %v84 = vld [vmem:[%s1 + $0xe4] sm:$0xf]
  %v85 = vld [vmem:[%s1 + $0xe8] sm:$0xf]
  %v86 = vld [vmem:[%s1 + $0xec] sm:$0xf]
  %v87 = vld [vmem:[%s1 + $0xf0] sm:$0xf]
  %v88 = vld [vmem:[%s1 + $0xf4] sm:$0xf]
  %v89 = vld [vmem:[%s1 + $0xf8] sm:$0xf]
  %v90 = vld [vmem:[%s1 + $0xfc] sm:$0xf]
  %v91 = vld [vmem:[%s1 + $0x100] sm:$0xf]
  %v92 = vld [vmem:[%s1 + $0x104] sm:$0xf]
  %v93 = vld [vmem:[%s1 + $0x108] sm:$0xf]
  %v94 = vld [vmem:[%s1 + $0x10c] sm:$0xf]
  %v95 = vld [vmem:[%s1 + $0x110] sm:$0xf]
  %v96 = vld [vmem:[%s1 + $0x114] sm:$0xf]
  %v97 = vld [vmem:[%s1 + $0x118] sm:$0xf]
  %v98 = vld [vmem:[%s1 + $0x11c] sm:$0xf]
  %v99 = vld [vmem:[%s1 + $0x120] sm:$0xf]
  %v100 = vld [vmem:[%s1 + $0x124] sm:$0xf]
  %v101 = vld [vmem:[%s1 + $0x128] sm:$0xf]
  %v102 = vld [vmem:[%s1 + $0x12c] sm:$0xf]
  %v103 = vld [vmem:[%s1 + $0x130] sm:$0xf]
  %v104 = vld [vmem:[%s1 + $0x134] sm:$0xf]
  %v105 = vld [vmem:[%s1 + $0x138] sm:$0xf]
  %v106 = vld [vmem:[%s1 + $0x13c] sm:$0xf]
  %v107 = vld [vmem:[%s1 + $0x140] sm:$0xf]
  %v108 = vld [vmem:[%s1 + $0x144] sm:$0xf]
  %v109 = vld [vmem:[%s1 + $0x148] sm:$0xf]
  %v110 = vld [vmem:[%s1 + $0x14c] sm:$0xf]
  %v111 = vld [vmem:[%s1 + $0x150] sm:$0xf]
  %v112 = vld [vmem:[%s1 + $0x154] sm:$0xf]
  %v113 = vld [vmem:[%s1 + $0x158] sm:$0xf]
  %v114 = vld [vmem:[%s1 + $0x15c] sm:$0xf]
  %v115 = vld [vmem:[%s1 + $0x160] sm:$0xf]
  %v116 = vld [vmem:[%s1 + $0x164] sm:$0xf]
  %v117 = vld [vmem:[%s1 + $0x168] sm:$0xf]
  %v118 = vld [vmem:[%s1 + $0x16c] sm:$0xf]
  %v119 = vld [vmem:[%s1 + $0x170] sm:$0xf]
  %v120 = vld [vmem:[%s1 + $0x174] sm:$0xf]
  %v121 = vld [vmem:[%s1 + $0x178] sm:$0xf]
  %v122 = vld [vmem:[%s1 + $0x17c] sm:$0xf]
  %v219 = vunpack.c.l.b16 %v27
  %v220 = vunpack.c.l.b16 %v28
  %v221 = vunpack.c.l.b16 %v29
  %v222 = vunpack.c.l.b16 %v30
  %v223 = vunpack.c.l.b16 %v31
  %v224 = vunpack.c.l.b16 %v32
  %v225 = vunpack.c.l.b16 %v33
  %v226 = vunpack.c.l.b16 %v34
  %v227 = vunpack.c.l.b16 %v35
  %v228 = vunpack.c.l.b16 %v36
  %v229 = vunpack.c.l.b16 %v37
  %v230 = vunpack.c.l.b16 %v38
  %v231 = vunpack.c.l.b16 %v39
  %v232 = vunpack.c.l.b16 %v40
  %v233 = vunpack.c.l.b16 %v41
  %v234 = vunpack.c.l.b16 %v42
  %v235 = vunpack.c.l.b16 %v43
  %v236 = vunpack.c.l.b16 %v44
  %v237 = vunpack.c.l.b16 %v45
  %v238 = vunpack.c.l.b16 %v46
  %v239 = vunpack.c.l.b16 %v47
  %v240 = vunpack.c.l.b16 %v48
  %v241 = vunpack.c.l.b16 %v49
  %v242 = vunpack.c.l.b16 %v50
  %v243 = vunpack.c.l.b16 %v51
  %v244 = vunpack.c.l.b16 %v52
  %v245 = vunpack.c.l.b16 %v53
  %v246 = vunpack.c.l.b16 %v54
  %v247 = vunpack.c.l.b16 %v55
  %v248 = vunpack.c.l.b16 %v56
  %v249 = vunpack.c.l.b16 %v57
  %v250 = vunpack.c.l.b16 %v58
  %v251 = vunpack.c.l.b16 %v59
  %v252 = vunpack.c.l.b16 %v60
  %v253 = vunpack.c.l.b16 %v61
  %v254 = vunpack.c.l.b16 %v62
  %v255 = vunpack.c.l.b16 %v63
  %v256 = vunpack.c.l.b16 %v64
  %v257 = vunpack.c.l.b16 %v65
  %v258 = vunpack.c.l.b16 %v66
  %v259 = vunpack.c.l.b16 %v67
  %v260 = vunpack.c.l.b16 %v68
  %v261 = vunpack.c.l.b16 %v69
  %v262 = vunpack.c.l.b16 %v70
  %v263 = vunpack.c.l.b16 %v71
  %v264 = vunpack.c.l.b16 %v72
  %v265 = vunpack.c.l.b16 %v73
  %v266 = vunpack.c.l.b16 %v74
  %v267 = vunpack.c.l.b16 %v75
  %v268 = vunpack.c.l.b16 %v76
  %v269 = vunpack.c.l.b16 %v77
  %v270 = vunpack.c.l.b16 %v78
  %v271 = vunpack.c.l.b16 %v79
  %v272 = vunpack.c.l.b16 %v80
  %v273 = vunpack.c.l.b16 %v81
  %v274 = vunpack.c.l.b16 %v82
  %v275 = vunpack.c.l.b16 %v83
  %v276 = vunpack.c.l.b16 %v84
  %v277 = vunpack.c.l.b16 %v85
  %v278 = vunpack.c.l.b16 %v86
  %v279 = vunpack.c.l.b16 %v87
  %v280 = vunpack.c.l.b16 %v88
  %v281 = vunpack.c.l.b16 %v89
  %v282 = vunpack.c.l.b16 %v90
  %v283 = vunpack.c.l.b16 %v91
  %v284 = vunpack.c.l.b16 %v92
  %v285 = vunpack.c.l.b16 %v93
  %v286 = vunpack.c.l.b16 %v94
  %v287 = vunpack.c.l.b16 %v95
  %v288 = vunpack.c.l.b16 %v96
  %v289 = vunpack.c.l.b16 %v97
  %v290 = vunpack.c.l.b16 %v98
  %v291 = vunpack.c.l.b16 %v99
  %v292 = vunpack.c.l.b16 %v100
  %v293 = vunpack.c.l.b16 %v101
  %v294 = vunpack.c.l.b16 %v102
  %v295 = vunpack.c.l.b16 %v103
  %v296 = vunpack.c.l.b16 %v104
  %v297 = vunpack.c.l.b16 %v105
  %v298 = vunpack.c.l.b16 %v106
  %v299 = vunpack.c.l.b16 %v107
  %v300 = vunpack.c.l.b16 %v108
  %v301 = vunpack.c.l.b16 %v109
  %v302 = vunpack.c.l.b16 %v110
  %v303 = vunpack.c.l.b16 %v111
  %v304 = vunpack.c.l.b16 %v112
  %v305 = vunpack.c.l.b16 %v113
  %v306 = vunpack.c.l.b16 %v114
  %v307 = vunpack.c.l.b16 %v115
  %v308 = vunpack.c.l.b16 %v116
  %v309 = vunpack.c.l.b16 %v117
  %v310 = vunpack.c.l.b16 %v118
  %v311 = vunpack.c.l.b16 %v119
  %v312 = vunpack.c.l.b16 %v120
  %v313 = vunpack.c.l.b16 %v121
  %v314 = vunpack.c.l.b16 %v122
  %v315 = vpack.c.b16 %v220, %v219
  %v316 = vpack.c.b16 %v222, %v221
  %v317 = vpack.c.b16 %v224, %v223
  %v318 = vpack.c.b16 %v226, %v225
  %v319 = vpack.c.b16 %v228, %v227
  %v320 = vpack.c.b16 %v230, %v229
  %v321 = vpack.c.b16 %v232, %v231
  %v322 = vpack.c.b16 %v234, %v233
  %v323 = vpack.c.b16 %v236, %v235
  %v324 = vpack.c.b16 %v238, %v237
  %v325 = vpack.c.b16 %v240, %v239
  %v326 = vpack.c.b16 %v242, %v241
  %v327 = vpack.c.b16 %v244, %v243
  %v328 = vpack.c.b16 %v246, %v245
  %v329 = vpack.c.b16 %v248, %v247
  %v330 = vpack.c.b16 %v250, %v249
  %v331 = vpack.c.b16 %v252, %v251
  %v332 = vpack.c.b16 %v254, %v253
  %v333 = vpack.c.b16 %v256, %v255
  %v334 = vpack.c.b16 %v258, %v257
  %v335 = vpack.c.b16 %v260, %v259
  %v336 = vpack.c.b16 %v262, %v261
  %v337 = vpack.c.b16 %v264, %v263
  %v338 = vpack.c.b16 %v266, %v265
  %v339 = vpack.c.b16 %v268, %v267
  %v340 = vpack.c.b16 %v270, %v269
  %v341 = vpack.c.b16 %v272, %v271
  %v342 = vpack.c.b16 %v274, %v273
  %v343 = vpack.c.b16 %v276, %v275
  %v344 = vpack.c.b16 %v278, %v277
  %v345 = vpack.c.b16 %v280, %v279
  %v346 = vpack.c.b16 %v282, %v281
  %v347 = vpack.c.b16 %v284, %v283
  %v348 = vpack.c.b16 %v286, %v285
  %v349 = vpack.c.b16 %v288, %v287
  %v350 = vpack.c.b16 %v290, %v289
  %v351 = vpack.c.b16 %v292, %v291
  %v352 = vpack.c.b16 %v294, %v293
  %v353 = vpack.c.b16 %v296, %v295
  %v354 = vpack.c.b16 %v298, %v297
  %v355 = vpack.c.b16 %v300, %v299
  %v356 = vpack.c.b16 %v302, %v301
  %v357 = vpack.c.b16 %v304, %v303
  %v358 = vpack.c.b16 %v306, %v305
  %v359 = vpack.c.b16 %v308, %v307
  %v360 = vpack.c.b16 %v310, %v309
  %v361 = vpack.c.b16 %v312, %v311
  %v362 = vpack.c.b16 %v314, %v313
  %411 = vmatprep.subr.bf16.mxu0 0
  %412 = vmatpush1.bf16.msra.mxu0 %v322
  %413 = vmatprep.subr.bf16.mxu0 0
  %414 = vmatpush1.bf16.msra.mxu0 %v321
  %415 = vmatprep.subr.bf16.mxu0 0
  %416 = vmatpush1.bf16.msra.mxu0 %v320
  %417 = vmatprep.subr.bf16.mxu0 0
  %418 = vmatpush1.bf16.msra.mxu0 %v319
  %419 = vmatprep.subr.bf16.mxu0 0
  %420 = vmatpush1.bf16.msra.mxu0 %v318
  %421 = vmatprep.subr.bf16.mxu0 0
  %422 = vmatpush1.bf16.msra.mxu0 %v317
  %423 = vmatprep.subr.bf16.mxu0 0
  %424 = vmatpush1.bf16.msra.mxu0 %v316
  %425 = vmatprep.subr.bf16.mxu0 0
  %426 = vmatpush1.bf16.msra.mxu0 %v315
  %427 = vmatprep.subr.bf16.mxu0 0
  %428 = vmatpush2.bf16.msra.mxu0 %v330
  %429 = vmatprep.subr.bf16.mxu0 0
  %430 = vmatpush2.bf16.msra.mxu0 %v329
  %431 = vmatprep.subr.bf16.mxu0 0
  %432 = vmatpush2.bf16.msra.mxu0 %v328
  %433 = vmatprep.subr.bf16.mxu0 0
  %434 = vmatpush2.bf16.msra.mxu0 %v327
  %435 = vmatprep.subr.bf16.mxu0 0
  %436 = vmatpush2.bf16.msra.mxu0 %v326
  %437 = vmatprep.subr.bf16.mxu0 0
  %438 = vmatpush2.bf16.msra.mxu0 %v325
  %439 = vmatprep.subr.bf16.mxu0 0
  %440 = vmatpush2.bf16.msra.mxu0 %v324
  %441 = vmatprep.subr.bf16.mxu0 0
  %442 = vmatpush2.bf16.msra.mxu0 %v323
  %443 = vmatprep.mubr.bf16.mxu0 %v22
  %444 = vmatmul.mubr.bf16.gmra.mxu0 %v21
  %v445 = vpop.f32.mrf.mxu0
  %v446 = vadd.f32 0.0, %v445
  %v447 = vpop.f32.mrf.mxu0
  %v448 = vpop.f32.mrf.mxu0
  %v449 = vpop.f32.mrf.mxu0
  %450 = vdwg.mxu0
  %451 = vmatprep.subr.bf16.mxu0 0
  %452 = vmatpush1.bf16.msra.mxu0 %v338
  %453 = vmatprep.subr.bf16.mxu0 0
  %454 = vmatpush1.bf16.msra.mxu0 %v337
  %455 = vmatprep.subr.bf16.mxu0 0
  %456 = vmatpush1.bf16.msra.mxu0 %v336
  %457 = vmatprep.subr.bf16.mxu0 0
  %458 = vmatpush1.bf16.msra.mxu0 %v335
  %459 = vmatprep.subr.bf16.mxu0 0
  %460 = vmatpush1.bf16.msra.mxu0 %v334
  %461 = vmatprep.subr.bf16.mxu0 0
  %462 = vmatpush1.bf16.msra.mxu0 %v333
  %463 = vmatprep.subr.bf16.mxu0 0
  %464 = vmatpush1.bf16.msra.mxu0 %v332
  %465 = vmatprep.subr.bf16.mxu0 0
  %466 = vmatpush1.bf16.msra.mxu0 %v331
  %467 = vmatprep.subr.bf16.mxu0 0
  %468 = vmatpush2.bf16.msra.mxu0 %v346
  %469 = vmatprep.subr.bf16.mxu0 0
  %470 = vmatpush2.bf16.msra.mxu0 %v345
  %471 = vmatprep.subr.bf16.mxu0 0
  %472 = vmatpush2.bf16.msra.mxu0 %v344
  %473 = vmatprep.subr.bf16.mxu0 0
  %474 = vmatpush2.bf16.msra.mxu0 %v343
  %475 = vmatprep.subr.bf16.mxu0 0
  %476 = vmatpush2.bf16.msra.mxu0 %v342
  %477 = vmatprep.subr.bf16.mxu0 0
  %478 = vmatpush2.bf16.msra.mxu0 %v341
  %479 = vmatprep.subr.bf16.mxu0 0
  %480 = vmatpush2.bf16.msra.mxu0 %v340
  %481 = vmatprep.subr.bf16.mxu0 0
  %482 = vmatpush2.bf16.msra.mxu0 %v339
  %483 = vmatprep.mubr.bf16.mxu0 %v24
  %484 = vmatmul.mubr.bf16.gmra.mxu0 %v23
  %v485 = vpop.f32.mrf.mxu0
  %v486 = vadd.f32 %v446, %v485
  %v487 = vpop.f32.mrf.mxu0
  %v488 = vpop.f32.mrf.mxu0
  %v489 = vpop.f32.mrf.mxu0
  %490 = vdwg.mxu0
  %491 = vmatprep.subr.bf16.mxu0 0
  %492 = vmatpush1.bf16.msra.mxu0 %v354
  %493 = vmatprep.subr.bf16.mxu0 0
  %494 = vmatpush1.bf16.msra.mxu0 %v353
  %495 = vmatprep.subr.bf16.mxu0 0
  %496 = vmatpush1.bf16.msra.mxu0 %v352
  %497 = vmatprep.subr.bf16.mxu0 0
  %498 = vmatpush1.bf16.msra.mxu0 %v351
  %499 = vmatprep.subr.bf16.mxu0 0
  %500 = vmatpush1.bf16.msra.mxu0 %v350
  %501 = vmatprep.subr.bf16.mxu0 0
  %502 = vmatpush1.bf16.msra.mxu0 %v349
  %503 = vmatprep.subr.bf16.mxu0 0
  %504 = vmatpush1.bf16.msra.mxu0 %v348
  %505 = vmatprep.subr.bf16.mxu0 0
  %506 = vmatpush1.bf16.msra.mxu0 %v347
  %507 = vmatprep.subr.bf16.mxu0 0
  %508 = vmatpush2.bf16.msra.mxu0 %v362
  %509 = vmatprep.subr.bf16.mxu0 0
  %510 = vmatpush2.bf16.msra.mxu0 %v361
  %511 = vmatprep.subr.bf16.mxu0 0
  %512 = vmatpush2.bf16.msra.mxu0 %v360
  %513 = vmatprep.subr.bf16.mxu0 0
  %514 = vmatpush2.bf16.msra.mxu0 %v359
  %515 = vmatprep.subr.bf16.mxu0 0
  %516 = vmatpush2.bf16.msra.mxu0 %v358
  %517 = vmatprep.subr.bf16.mxu0 0
  %518 = vmatpush2.bf16.msra.mxu0 %v357
  %519 = vmatprep.subr.bf16.mxu0 0
  %520 = vmatpush2.bf16.msra.mxu0 %v356
  %521 = vmatprep.subr.bf16.mxu0 0
  %522 = vmatpush2.bf16.msra.mxu0 %v355
  %523 = vmatprep.mubr.bf16.mxu0 %v26
  %524 = vmatmul.mubr.bf16.gmra.mxu0 %v25
  %v525 = vpop.f32.mrf.mxu0
  %v526 = vadd.f32 %v486, %v525
  %v527 = vpop.f32.mrf.mxu0
  %v528 = vpop.f32.mrf.mxu0
  %v529 = vpop.f32.mrf.mxu0
  %530 = vdwg.mxu0
  %v531 = vld [vmem:[%s2] sm:$0x1]
  %v533 = vlaneseq
  %v534 = vshrl.u32 %v533, 7
  %v535 = vsub.s32 0, %v534
  %v536 = vrot.slane %v531, %v535
  %v538 = vadd.f32 %v526, %v536
  %vm539 = vcmask 64512
  %540 = vst.msk [vmem:[%s3] sm:$0xff] %vm539, %v538
  // Predicated region
  $region14: #{sentiment_classifier_forward.1} parent=0 // pred_check
    _
  $region15: #{sentiment_classifier_forward.1} parent=0 // pred_check_branch
    %542 = sbr.rel (0) target = $region17
  $region16: #{sentiment_classifier_forward.1} parent=0 // pred_region
    _
  $region17: #{sentiment_classifier_forward.1} parent=0 // pred_fallthru
    _
  // Predicated region
  $region18: #{sentiment_classifier_forward.1} parent=0 // pred_check
    _
  $region19: #{sentiment_classifier_forward.1} parent=0 // pred_check_branch
    %544 = sbr.rel (0) target = $region21
  $region20: #{sentiment_classifier_forward.1} parent=0 // pred_region
    _
  $region21: #{sentiment_classifier_forward.1} parent=0 // pred_fallthru
    _

</llo_original>
